<compile_context>
chip_gen: v6e
topology: v6e:2x2x1
jax: 0.10.0
libtpu: 0.0.40
codegen_flags: <defaults>
</compile_context>

<pallas_src>
import functools

import jax
import jax.numpy as jnp
from jax.experimental import pallas as pl
from jax.experimental.pallas import tpu as pltpu


# ---------------------------------------------------------------------------
# Zero-traffic identity kernel: output aliases input, body is a no-op.
# ---------------------------------------------------------------------------

def _noop_alias_kernel(x_hbm_ref, o_hbm_ref):
    # The output buffer IS the input buffer (input_output_aliases={0: 0}), and
    # an identity moves no data, so the body issues no loads, stores, or DMAs.
    del x_hbm_ref, o_hbm_ref


def identity_alias(x: jax.Array) -> jax.Array:
    """Identity expressed as a Pallas kernel with zero kernel-issued HBM traffic.

    Inside a jitted graph (producer internal / argument donated) XLA elides the
    copy entirely; called eagerly on a live argument, XLA inserts at most one
    defensive copy outside the kernel.
    """
    return pl.pallas_call(
        _noop_alias_kernel,
        out_shape=jax.ShapeDtypeStruct(x.shape, x.dtype),
        in_specs=[pl.BlockSpec(memory_space=pl.ANY)],   # stay in HBM, no auto-DMA
        out_specs=pl.BlockSpec(memory_space=pl.ANY),
        input_output_aliases={0: 0},                    # output <- input buffer
        cost_estimate=pl.CostEstimate(flops=0, transcendentals=0,
                                      bytes_accessed=0),
    )(x)


def identity(x: jax.Array, *, force_kernel: bool = False) -> jax.Array:
    """Forward pass of nn.Identity: return x.

    Perf review item #1: never launch a kernel for an identity — return the
    input as-is (this also subsumes item #2's small-size bypass, since launch
    overhead always exceeds the zero work to do). When a Pallas kernel launch
    is explicitly required, use the aliased no-op kernel above.
    """
    if x.size == 0 or not force_kernel:
        return x
    return identity_alias(x)


# ---------------------------------------------------------------------------
# Optional materializing copy kernel (fresh output buffer), tuned per review.
# ---------------------------------------------------------------------------

_LANE_CANDIDATES = (8192, 4096, 2048, 1024, 512, 256, 128)
# itemsize -> packed sublane multiple (f32: 8, bf16/f16: 16, int8/fp8: 32).
_SUBLANE_MULTIPLE = {4: 8, 2: 16, 1: 32}
# Max bytes for which a single (1, n) full-extent block is acceptable when the
# element count is not a multiple of 128 (robustness fix from the review).
_ODD_SINGLE_BLOCK_BYTES = 2 * 1024 * 1024


def _is_v7x() -> bool:
    try:
        kind = jax.devices()[0].device_kind.lower().replace(" ", "")
        return ("v7" in kind) or ("tpu7" in kind)
    except Exception:
        return False


@functools.lru_cache(maxsize=1)
def _block_and_vmem_bytes():
    # v7x: at ~3.2 TB/s a 4 MiB block drains in ~2.5 us, so the ~0.35 us
    # per-grid-step overhead is ~12-15% -> use 8 MiB blocks there; the
    # double-buffered footprint 2*(8+8)=32 MiB still fits the 64 MiB physical
    # VMEM with a 40 MiB scoped limit.
    # v5e/v6e: 4 MiB blocks already sit at the measured 85-86% roofline
    # plateau; keep the explicit 32 MiB limit (v5e's scoped default is 16 MiB,
    # exactly the double-buffered footprint with zero headroom).
    if _is_v7x():
        return 8 * 1024 * 1024, 40 * 1024 * 1024
    return 4 * 1024 * 1024, 32 * 1024 * 1024


def _round_up(v: int, m: int) -> int:
    return -(-v // m) * m


def _round_down(v: int, m: int) -> int:
    return (v // m) * m


def _choose_layout(n: int, itemsize: int):
    """Pick a lane-dense (rows, lanes) factorization and a block row count.

    Returns (rows, lanes, block_rows), or None if n is not a multiple of 128
    (caller decides how to handle that case safely).
    """
    lanes = next((c for c in _LANE_CANDIDATES if n % c == 0), None)
    if lanes is None:
        return None
    sub = _SUBLANE_MULTIPLE.get(itemsize, 8)
    rows = n // lanes
    if rows <= sub:
        # Small tensor: one full-extent block, single grid step.
        return rows, lanes, rows
    target_bytes, _ = _block_and_vmem_bytes()
    block_rows = min(rows, max(sub, target_bytes // (lanes * itemsize)))
    # Dtype-aware sublane rounding keeps the vld/vst path full-width.
    block_rows = max(sub, _round_down(block_rows, sub))
    # Keep >= 2 grid steps when possible so megacore / v7x's two TensorCores
    # both have DMA work to drive.
    # TODO(synk): on v7x consider pltpu.CORE_PARALLEL on this axis for an
    # explicit two-TensorCore split instead of relying on megacore sharding.
    if rows >= 2 * sub:
        block_rows = min(block_rows, max(sub, _round_up(pl.cdiv(rows, 2), sub)))
    return rows, lanes, block_rows


def _copy_kernel(x_ref, o_ref):
    # Pure pass-through: copy the current VMEM tile to the output tile.
    o_ref[...] = x_ref[...]


def _tiled_copy_2d(x2d: jax.Array, rows: int, lanes: int, block_rows: int):
    n_bytes = x2d.size * jnp.dtype(x2d.dtype).itemsize
    _, vmem_limit = _block_and_vmem_bytes()
    grid = (pl.cdiv(rows, block_rows),)
    return pl.pallas_call(
        _copy_kernel,
        out_shape=jax.ShapeDtypeStruct((rows, lanes), x2d.dtype),
        grid_spec=pltpu.PrefetchScalarGridSpec(
            num_scalar_prefetch=0,
            grid=grid,
            in_specs=[pl.BlockSpec((block_rows, lanes), lambda i: (i, 0))],
            out_specs=pl.BlockSpec((block_rows, lanes), lambda i: (i, 0)),
        ),
        compiler_params=pltpu.CompilerParams(
            dimension_semantics=("parallel",),
            vmem_limit_bytes=vmem_limit,
        ),
        # Pure memory traffic: tells XLA's scheduler there are no FLOPs here.
        cost_estimate=pl.CostEstimate(
            flops=0, transcendentals=0, bytes_accessed=2 * n_bytes),
    )(x2d)


def identity_copy(x: jax.Array) -> jax.Array:
    """Identity that materializes a fresh output buffer via a tiled Pallas copy."""
    orig_shape = x.shape
    n = x.size
    if n == 0:
        return x
    itemsize = jnp.dtype(x.dtype).itemsize
    layout = _choose_layout(n, itemsize)
    if layout is None:
        # n is not a multiple of 128 (review robustness fix): a single (1, n)
        # block is only safe while it fits comfortably in VMEM; beyond that an
        # identity needs no fresh copy, so fall back to the zero-traffic
        # aliased no-op kernel instead of building a VMEM-blowing giant block.
        if n * itemsize <= _ODD_SINGLE_BLOCK_BYTES:
            rows, lanes, block_rows = 1, n, 1
        else:
            return identity_alias(x)
    else:
        rows, lanes, block_rows = layout
    # Flat reshape is layout metadata only (no pad, no slice, no extra pass).
    out2d = _tiled_copy_2d(x.reshape(rows, lanes), rows, lanes, block_rows)
    return out2d.reshape(orig_shape)


if __name__ == "__main__":
    key = jax.random.PRNGKey(0)
    k0, k1 = jax.random.split(key)

    # Shapes consistent with a ViT-ish feature map: NCHW = (2, 4, 16, 16).
    x = jax.random.normal(k0, (2, 4, 16, 16), dtype=jnp.float32)

    # 1) Default path: true no-op (the optimal identity — no kernel, no copy).
    y0 = identity(x)
    jax.block_until_ready(y0)
    assert y0.shape == x.shape and y0.dtype == x.dtype
    assert bool(jnp.all(y0 == x))

    # 2) Pallas no-op alias kernel (forced, so a Pallas kernel actually runs).
    y1 = identity(x, force_kernel=True)
    jax.block_until_ready(y1)
    assert y1.shape == x.shape and y1.dtype == x.dtype
    assert bool(jnp.all(y1 == x))

    # 3) Materializing tiled copy kernel, f32 path (single full-extent block).
    y2 = identity_copy(x)
    jax.block_until_ready(y2)
    assert y2.shape == x.shape and y2.dtype == x.dtype
    assert bool(jnp.all(y2 == x))

    # 4) Materializing tiled copy kernel, bf16 path (dtype-aware sublane
    #    rounding, two grid steps).
    xb = jax.random.normal(k1, (32, 64, 128), dtype=jnp.bfloat16)
    y3 = identity_copy(xb)
    jax.block_until_ready(y3)
    assert y3.shape == xb.shape and y3.dtype == xb.dtype
    assert bool(jnp.all(y3 == xb))

    print("KERNEL_OK")
</pallas_src>

<mosaic_0001>
module attributes {stable_mosaic.version = 11 : i64} {
  func.func @_noop_alias_kernel(%arg0: memref<2x4x16x16xf32, #tpu.memory_space<any>>, %arg1: memref<2x4x16x16xf32, #tpu.memory_space<any>>) attributes {dimension_semantics = [], scalar_prefetch = 0 : i64, scratch_operands = 0 : i64, tpu.core_type = #tpu.core_type<tc>} {
    return
  }
}

</mosaic_0001>

<llo_original>
// kernel: tpu_custom_call.1
$region0: #{tpu_custom_call.1}
  #allocation0 [shape = 'u32[]', space=smem, size = 0x4, offset = 0x4, fixed_abs, tag = 'smem constant byte address 0x4 - core index']
  #allocation1 [shape = 'u32[144,128]{1,0:T(1,128)}', space=vmem, size = 0x12000, scoped, tag = 'internal scratch']
  %s0 = inlined_call_operand.hbm [shape: f32[2,4,16,16], index: 0, kind: input, shape index: {}, may-alias: {0,1}]
  %s1 = inlined_call_operand.hbm [shape: f32[2,4,16,16], index: 1, kind: output, shape index: {}, may-alias: {0,1}]
  %s2 = sld [smem:[#allocation0]]
  $region2: #{tpu_custom_call.1} parent=0
    _
  %s4 = ssub.s32 1, %s2
  %s5 = scalar_select 0, %s4, %s2

</llo_original>
